<compile_context>
chip_gen: v7x
topology: tpu7x:2x2x1
jax: 0.10.0
libtpu: 0.0.40
codegen_flags: <defaults>
</compile_context>

<pallas_src>
import functools

import jax
import jax.numpy as jnp
from jax.experimental import pallas as pl
from jax.experimental.pallas import tpu as pltpu


def _round_up(x: int, m: int) -> int:
    return ((x + m - 1) // m) * m


# ---------------------------------------------------------------------------
# Kernels
# ---------------------------------------------------------------------------
def _dense_wr_kernel(x_ref, w_ref, b_ref, *rest, resnet: bool, apply_relu: bool):
    """Weight-resident DenseBlock: whole [K, N] weight lives in VMEM.

    Grid is (M/tm,) only; each x row-block and the weight are read exactly once.
    """
    if resnet:
        res_ref, o_ref = rest
    else:
        (o_ref,) = rest

    y = jnp.dot(x_ref[...], w_ref[...], preferred_element_type=jnp.float32)
    y = y + b_ref[...].astype(jnp.float32)
    if apply_relu:
        y = jnp.maximum(y, 0.0)
    if resnet:
        y = y + res_ref[...].astype(jnp.float32)
    o_ref[...] = y.astype(o_ref.dtype)


def _dense_tiled_kernel(x_ref, w_ref, b_ref, *rest,
                        resnet: bool, apply_relu: bool, acc_in_out: bool):
    """Output-stationary M/N/K-tiled DenseBlock (K is the last, sequential axis)."""
    if acc_in_out:
        # f32 output: accumulate directly into the resident output block.
        if resnet:
            res_ref, o_ref = rest
        else:
            (o_ref,) = rest
        acc_ref = o_ref
    else:
        if resnet:
            res_ref, o_ref, acc_ref = rest
        else:
            o_ref, acc_ref = rest

    k = pl.program_id(2)

    # Fold the bias into the accumulator init (saves a full-tile VPU add later).
    @pl.when(k == 0)
    def _():
        acc_ref[...] = jnp.broadcast_to(
            b_ref[...].astype(jnp.float32), acc_ref.shape)

    # MXU matmul over this K slab, f32 accumulate; weight is already [K, N].
    acc_ref[...] += jnp.dot(x_ref[...], w_ref[...],
                            preferred_element_type=jnp.float32)

    # Epilogue on the last K step: activation, optional residual, cast, store.
    @pl.when(k == pl.num_programs(2) - 1)
    def _():
        y = acc_ref[...]
        if apply_relu:
            y = jnp.maximum(y, 0.0)
        if resnet:
            y = y + res_ref[...].astype(jnp.float32)
        o_ref[...] = y.astype(o_ref.dtype)


# ---------------------------------------------------------------------------
# Wrappers
# ---------------------------------------------------------------------------
def prepare_dense_params(weight, bias, *, mxu_dtype=None):
    """Hoist per-layer weight prep out of the hot path (do this ONCE per layer).

    weight: [out_features, in_features]  (PyTorch nn.Linear convention)
    bias:   [out_features]
    mxu_dtype: e.g. jnp.bfloat16 to feed the MXU in low precision (f32 accumulate).
    """
    out_f, in_f = weight.shape
    w_t = weight.T                      # [K, N] — MXU-natural, no in-kernel transpose
    if mxu_dtype is not None:
        w_t = w_t.astype(mxu_dtype)
    b = bias.astype(jnp.float32).reshape(1, out_f)
    return dict(w_t=w_t, b=b, in_f=in_f, out_f=out_f, mxu_dtype=mxu_dtype)


def dense_block_prepared(x, params, *, resnet=False, apply_relu=True,
                         tm=512, tn=512, tk=512, out_dtype=None,
                         vmem_limit_bytes=None,
                         weight_resident_max_bytes=12 * 1024 * 1024):
    """Fused DenseBlock forward: relu(x @ W^T + b) (+ x if resnet)."""
    m, in_f = x.shape
    assert in_f == params["in_f"]
    out_f = params["out_f"]
    mxu_dtype = params["mxu_dtype"]
    if resnet:
        assert in_f == out_f, "resnet DenseBlock requires in_features == out_features"
    if out_dtype is None:
        out_dtype = x.dtype

    x_mxu = x.astype(mxu_dtype) if mxu_dtype is not None else x
    # Residual also travels in the MXU dtype (halves its HBM read with bf16);
    # the add itself happens in f32 inside the kernel.
    res = x_mxu if resnet else None

    x_isize = jnp.dtype(x_mxu.dtype).itemsize
    w_isize = jnp.dtype(params["w_t"].dtype).itemsize
    o_isize = jnp.dtype(out_dtype).itemsize

    tm_eff = min(tm, _round_up(m, 8))
    m_pad = _round_up(m, tm_eff)
    n_full = _round_up(out_f, 128)
    k_full = _round_up(in_f, 128)

    # Conservative VMEM estimate for the weight-resident path (everything
    # counted double-buffered).
    wr_bytes = (2 * tm_eff * k_full * x_isize
                + 2 * k_full * n_full * w_isize
                + 2 * n_full * 4
                + 2 * tm_eff * n_full * o_isize)
    if resnet:
        wr_bytes += 2 * tm_eff * n_full * x_isize
    use_weight_resident = wr_bytes <= weight_resident_max_bytes

    if use_weight_resident:
        k_pad, n_pad = k_full, n_full
        grid = (m_pad // tm_eff,)
        x_p = jnp.pad(x_mxu, ((0, m_pad - m), (0, k_pad - in_f)))
        w_p = jnp.pad(params["w_t"], ((0, k_pad - in_f), (0, n_pad - out_f)))
        b_p = jnp.pad(params["b"], ((0, 0), (0, n_pad - out_f)))
        inputs = [x_p, w_p, b_p]
        in_specs = [
            pl.BlockSpec((tm_eff, k_pad), lambda i: (i, 0)),     # x row-block
            pl.BlockSpec((k_pad, n_pad), lambda i: (0, 0)),      # resident weight
            pl.BlockSpec((1, n_pad), lambda i: (0, 0)),          # bias row
        ]
        if resnet:
            res_p = jnp.pad(res, ((0, m_pad - m), (0, n_pad - out_f)))
            inputs.append(res_p)
            in_specs.append(pl.BlockSpec((tm_eff, n_pad), lambda i: (i, 0)))
        out_specs = pl.BlockSpec((tm_eff, n_pad), lambda i: (i, 0))
        scratch_shapes = []
        kernel = functools.partial(_dense_wr_kernel,
                                   resnet=resnet, apply_relu=apply_relu)
        dim_sem = ("parallel",)
    else:
        tn_eff = min(tn, n_full)
        tk_eff = min(tk, k_full)
        n_pad = _round_up(out_f, tn_eff)
        k_pad = _round_up(in_f, tk_eff)
        grid = (m_pad // tm_eff, n_pad // tn_eff, k_pad // tk_eff)
        x_p = jnp.pad(x_mxu, ((0, m_pad - m), (0, k_pad - in_f)))
        w_p = jnp.pad(params["w_t"], ((0, k_pad - in_f), (0, n_pad - out_f)))
        b_p = jnp.pad(params["b"], ((0, 0), (0, n_pad - out_f)))
        inputs = [x_p, w_p, b_p]
        in_specs = [
            pl.BlockSpec((tm_eff, tk_eff), lambda i, j, k: (i, k)),
            pl.BlockSpec((tk_eff, tn_eff), lambda i, j, k: (k, j)),
            pl.BlockSpec((1, tn_eff), lambda i, j, k: (0, j)),
        ]
        if resnet:
            res_p = jnp.pad(res, ((0, m_pad - m), (0, n_pad - out_f)))
            inputs.append(res_p)
            in_specs.append(pl.BlockSpec((tm_eff, tn_eff), lambda i, j, k: (i, j)))
        out_specs = pl.BlockSpec((tm_eff, tn_eff), lambda i, j, k: (i, j))
        # f32 output => accumulate straight into the resident output block.
        acc_in_out = jnp.dtype(out_dtype) == jnp.dtype(jnp.float32)
        scratch_shapes = ([] if acc_in_out
                          else [pltpu.VMEM((tm_eff, tn_eff), jnp.float32)])
        kernel = functools.partial(_dense_tiled_kernel, resnet=resnet,
                                   apply_relu=apply_relu, acc_in_out=acc_in_out)
        dim_sem = ("parallel", "parallel", "arbitrary")

    cp_kwargs = dict(dimension_semantics=dim_sem)
    if vmem_limit_bytes is not None:
        cp_kwargs["vmem_limit_bytes"] = vmem_limit_bytes

    bytes_accessed = int(
        sum(int(a.size) * jnp.dtype(a.dtype).itemsize for a in inputs)
        + m_pad * n_pad * o_isize)
    cost = pl.CostEstimate(flops=int(2 * m_pad * k_pad * n_pad),
                           transcendentals=0,
                           bytes_accessed=bytes_accessed)

    out_p = pl.pallas_call(
        kernel,
        out_shape=jax.ShapeDtypeStruct((m_pad, n_pad), out_dtype),
        grid_spec=pltpu.PrefetchScalarGridSpec(
            num_scalar_prefetch=0,
            grid=grid,
            in_specs=in_specs,
            out_specs=out_specs,
            scratch_shapes=scratch_shapes,
        ),
        compiler_params=pltpu.CompilerParams(**cp_kwargs),
        cost_estimate=cost,
    )(*inputs)

    return out_p[:m, :out_f]


def dense_block(x, weight, bias, *, resnet=False, apply_relu=True,
                mxu_dtype=None, **kwargs):
    """Convenience wrapper (prep + call). Prefer prepare_dense_params + the
    prepared call in a training loop so weight prep is not redone per step."""
    params = prepare_dense_params(weight, bias, mxu_dtype=mxu_dtype)
    return dense_block_prepared(x, params, resnet=resnet,
                                apply_relu=apply_relu, **kwargs)


# ---------------------------------------------------------------------------
# DLRMResNet forward
# ---------------------------------------------------------------------------
def prepare_dlrm_params(bot_weights, bot_biases, top_weights, top_biases,
                        embedding_table, *, mxu_dtype=None):
    return dict(
        bot=[prepare_dense_params(w, b, mxu_dtype=mxu_dtype)
             for w, b in zip(bot_weights, bot_biases)],
        top=[prepare_dense_params(w, b, mxu_dtype=mxu_dtype)
             for w, b in zip(top_weights, top_biases)],
        embedding=embedding_table,
    )


def dlrm_resnet_forward(x, params, *, num_dense_features=13,
                        num_sparse_features=26, vocab_size, embed_dim,
                        **block_kwargs):
    batch = x.shape[0]
    dense = x[:, :num_dense_features]
    sparse = x[:, num_dense_features:num_dense_features + num_sparse_features]

    # Bottom MLP: layer 0 plain, later layers residual; all with ReLU.
    h = dense
    for li, p in enumerate(params["bot"]):
        h = dense_block_prepared(h, p, resnet=(li > 0), apply_relu=True,
                                 **block_kwargs)
    embedded_dense = h

    # Embedding lookup.
    # TODO(synk): data-dependent gather (index_select) is left to XLA's native
    # gather; a Pallas DMA-gather kernel only pays off at production vocab sizes.
    idx = (sparse.astype(jnp.int32) % vocab_size).reshape(-1)
    embedded_sparse = jnp.take(params["embedding"], idx, axis=0)
    embedded_sparse = embedded_sparse.reshape(
        batch, num_sparse_features * embed_dim)

    top_in = jnp.concatenate([embedded_dense, embedded_sparse], axis=1)

    # Top MLP: layer 0 plain+ReLU, middle layers residual+ReLU, last plain no ReLU.
    # TODO(synk): nn.Dropout on layer n-2 is not implemented (inactive at the
    # default dropout_rate=0.0).
    n_top = len(params["top"])
    h = top_in
    for li, p in enumerate(params["top"]):
        resnet = (li != 0) and (li != n_top - 1)
        relu = (li < n_top - 1)
        h = dense_block_prepared(h, p, resnet=resnet, apply_relu=relu,
                                 **block_kwargs)
    return h


# ---------------------------------------------------------------------------
# Pure-JAX reference
# ---------------------------------------------------------------------------
def _ref_dense_block(x, weight, bias, *, resnet, apply_relu, mxu_dtype):
    if mxu_dtype is not None:
        a = x.astype(mxu_dtype)
        w = weight.astype(mxu_dtype)
        y = jax.lax.dot_general(a, w, (((1,), (1,)), ((), ())),
                                preferred_element_type=jnp.float32)
    else:
        y = jax.lax.dot_general(x, weight, (((1,), (1,)), ((), ())),
                                precision=jax.lax.Precision.HIGHEST)
    y = y + bias.astype(jnp.float32)
    if apply_relu:
        y = jnp.maximum(y, 0.0)
    if resnet:
        r = (x.astype(mxu_dtype).astype(jnp.float32)
             if mxu_dtype is not None else x)
        y = y + r
    return y.astype(x.dtype)


def _ref_forward(x, bot_w, bot_b, top_w, top_b, emb, *, num_dense, num_sparse,
                 vocab_size, embed_dim, mxu_dtype=None):
    batch = x.shape[0]
    dense = x[:, :num_dense]
    sparse = x[:, num_dense:num_dense + num_sparse]
    h = dense
    for li, (w, b) in enumerate(zip(bot_w, bot_b)):
        h = _ref_dense_block(h, w, b, resnet=(li > 0), apply_relu=True,
                             mxu_dtype=mxu_dtype)
    idx = (sparse.astype(jnp.int32) % vocab_size).reshape(-1)
    es = jnp.take(emb, idx, axis=0).reshape(batch, num_sparse * embed_dim)
    h = jnp.concatenate([h, es], axis=1)
    n_top = len(top_w)
    for li, (w, b) in enumerate(zip(top_w, top_b)):
        resnet = (li != 0) and (li != n_top - 1)
        relu = (li < n_top - 1)
        h = _ref_dense_block(h, w, b, resnet=resnet, apply_relu=relu,
                             mxu_dtype=mxu_dtype)
    return h


if __name__ == "__main__":
    key = jax.random.PRNGKey(0)
    keys = jax.random.split(key, 32)
    kit = iter(keys)

    # Small shapes consistent with the module structure.
    batch = 16
    num_dense = 13
    num_sparse = 26
    vocab_size = 64
    embed_dim = 8
    mlp_bottom_dims = (32, 32, 32)
    mlp_top_dims = (64, 64, 64, 64, 1)

    dense_feats = jax.random.normal(next(kit), (batch, num_dense), dtype=jnp.float32)
    sparse_ids = jax.random.randint(next(kit), (batch, num_sparse), 0, 1000)
    x = jnp.concatenate([dense_feats, sparse_ids.astype(jnp.float32)], axis=1)

    # PyTorch nn.Linear-shaped params: W [out, in], b [out].
    bot_w, bot_b = [], []
    in_f = num_dense
    for d in mlp_bottom_dims:
        bot_w.append(jax.random.normal(next(kit), (d, in_f), dtype=jnp.float32) * 0.1)
        bot_b.append(jax.random.normal(next(kit), (d,), dtype=jnp.float32) * 0.1)
        in_f = d

    fan_in = num_sparse * embed_dim + mlp_bottom_dims[-1]
    top_w, top_b = [], []
    for d in mlp_top_dims:
        top_w.append(jax.random.normal(next(kit), (d, fan_in), dtype=jnp.float32) * 0.1)
        top_b.append(jax.random.normal(next(kit), (d,), dtype=jnp.float32) * 0.1)
        fan_in = d

    emb_table = (jax.random.uniform(next(kit), (vocab_size, embed_dim),
                                    dtype=jnp.float32)
                 / jnp.sqrt(jnp.float32(vocab_size)))

    # ---- f32 MXU path (bit-faithful to the PyTorch f32 module) ----
    params_f32 = prepare_dlrm_params(bot_w, bot_b, top_w, top_b, emb_table,
                                     mxu_dtype=None)
    logits = dlrm_resnet_forward(x, params_f32,
                                 num_dense_features=num_dense,
                                 num_sparse_features=num_sparse,
                                 vocab_size=vocab_size, embed_dim=embed_dim)
    logits = jax.block_until_ready(logits)
    ref = _ref_forward(x, bot_w, bot_b, top_w, top_b, emb_table,
                       num_dense=num_dense, num_sparse=num_sparse,
                       vocab_size=vocab_size, embed_dim=embed_dim,
                       mxu_dtype=None)
    assert logits.shape == (batch, 1)
    assert jnp.allclose(logits, ref, atol=1e-3, rtol=1e-3), (
        "f32 mismatch, max abs err = %f" % float(jnp.max(jnp.abs(logits - ref))))

    # ---- bf16 MXU-operand path (recommended default on v6e/v7x) ----
    params_bf16 = prepare_dlrm_params(bot_w, bot_b, top_w, top_b, emb_table,
                                      mxu_dtype=jnp.bfloat16)
    logits_bf16 = dlrm_resnet_forward(x, params_bf16,
                                      num_dense_features=num_dense,
                                      num_sparse_features=num_sparse,
                                      vocab_size=vocab_size, embed_dim=embed_dim)
    logits_bf16 = jax.block_until_ready(logits_bf16)
    ref_bf16 = _ref_forward(x, bot_w, bot_b, top_w, top_b, emb_table,
                            num_dense=num_dense, num_sparse=num_sparse,
                            vocab_size=vocab_size, embed_dim=embed_dim,
                            mxu_dtype=jnp.bfloat16)
    assert jnp.allclose(logits_bf16, ref_bf16, atol=2e-2, rtol=2e-2), (
        "bf16 mismatch, max abs err = %f"
        % float(jnp.max(jnp.abs(logits_bf16 - ref_bf16))))

    # ---- also exercise the K-tiled fallback kernel (used for huge weights) ----
    h_tiled = dense_block(x[:, :num_dense], bot_w[0], bot_b[0],
                          resnet=False, apply_relu=True,
                          weight_resident_max_bytes=0, tm=128, tn=128, tk=128)
    h_tiled = jax.block_until_ready(h_tiled)
    r_tiled = _ref_dense_block(x[:, :num_dense], bot_w[0], bot_b[0],
                               resnet=False, apply_relu=True, mxu_dtype=None)
    assert jnp.allclose(h_tiled, r_tiled, atol=1e-4, rtol=1e-4)

    h_tiled_res = dense_block(h_tiled, bot_w[1], bot_b[1],
                              resnet=True, apply_relu=True,
                              weight_resident_max_bytes=0, tm=128, tn=128, tk=128)
    h_tiled_res = jax.block_until_ready(h_tiled_res)
    r_tiled_res = _ref_dense_block(r_tiled, bot_w[1], bot_b[1],
                                   resnet=True, apply_relu=True, mxu_dtype=None)
    assert jnp.allclose(h_tiled_res, r_tiled_res, atol=1e-4, rtol=1e-4)

    # Tiled path with bf16 operands and bf16 output (uses the f32 scratch acc).
    h_tiled_bf16 = dense_block(x[:, :num_dense], bot_w[0], bot_b[0],
                               resnet=False, apply_relu=True,
                               mxu_dtype=jnp.bfloat16, out_dtype=jnp.bfloat16,
                               weight_resident_max_bytes=0,
                               tm=128, tn=128, tk=128)
    h_tiled_bf16 = jax.block_until_ready(h_tiled_bf16)
    r_tiled_bf16 = _ref_dense_block(x[:, :num_dense], bot_w[0], bot_b[0],
                                    resnet=False, apply_relu=True,
                                    mxu_dtype=jnp.bfloat16)
    assert jnp.allclose(h_tiled_bf16.astype(jnp.float32), r_tiled_bf16,
                        atol=2e-2, rtol=2e-2)

    print("KERNEL_OK")
</pallas_src>

<mosaic_0001>
module attributes {stable_mosaic.version = 11 : i64} {
  func.func @_dense_wr_kernel(%arg0: i32, %arg1: memref<16x128xf32, #tpu.memory_space<vmem>>, %arg2: memref<128x128xf32, #tpu.memory_space<vmem>>, %arg3: memref<1x128xf32, #tpu.memory_space<vmem>>, %arg4: memref<16x128xf32, #tpu.memory_space<vmem>>) attributes {dimension_semantics = [#tpu.dimension_semantics<parallel>], iteration_bounds = array<i64: 1>, scalar_prefetch = 0 : i64, scratch_operands = 0 : i64, tpu.core_type = #tpu.core_type<tc>, window_params = [{transform_indices = @transform_0, window_bounds = array<i64: 16, 128>}, {pipeline_mode = #tpu.pipeline_mode<synchronous>, transform_indices = @transform_1, window_bounds = array<i64: 128, 128>}, {pipeline_mode = #tpu.pipeline_mode<synchronous>, transform_indices = @transform_2, window_bounds = array<i64: 1, 128>}, {transform_indices = @transform_3, window_bounds = array<i64: 16, 128>}]} {
    %c0 = arith.constant 0 : index
    %c0_0 = arith.constant 0 : index
    %0 = vector.load %arg1[%c0, %c0_0] : memref<16x128xf32, #tpu.memory_space<vmem>>, vector<16x128xf32>
    %c0_1 = arith.constant 0 : index
    %c0_2 = arith.constant 0 : index
    %1 = vector.load %arg2[%c0_1, %c0_2] : memref<128x128xf32, #tpu.memory_space<vmem>>, vector<128x128xf32>
    %cst = arith.constant dense<0.000000e+00> : vector<16x128xf32>
    %2 = tpu.matmul %0, %1, %cst {dimension_numbers = #tpu.dot_dimension_numbers<[1], [0], [0], [1], [0, 0, 1, 1], [], []>} : vector<16x128xf32>, vector<128x128xf32>, vector<16x128xf32> -> vector<16x128xf32>
    %c0_3 = arith.constant 0 : index
    %c0_4 = arith.constant 0 : index
    %3 = vector.load %arg3[%c0_3, %c0_4] : memref<1x128xf32, #tpu.memory_space<vmem>>, vector<1x128xf32>
    %4 = vector.broadcast %3 : vector<1x128xf32> to vector<16x128xf32>
    %5 = arith.addf %2, %4 : vector<16x128xf32>
    %cst_5 = arith.constant 0.000000e+00 : f32
    %6 = vector.broadcast %cst_5 : f32 to vector<16x128xf32>
    %7 = arith.maximumf %5, %6 : vector<16x128xf32>
    %c0_6 = arith.constant 0 : index
    %c0_7 = arith.constant 0 : index
    %8 = vector.load %arg4[%c0_6, %c0_7] : memref<16x128xf32, #tpu.memory_space<vmem>>, vector<16x128xf32>
    tpu.vector_store %arg4[%c0_6, %c0_7], %7 {strides = array<i32>} : memref<16x128xf32, #tpu.memory_space<vmem>>, vector<16x128xf32>,
    return
  }
  func.func @transform_0(%arg0: i32) -> (i32, i32) {
    %c0_i32 = arith.constant 0 : i32
    %c0_i32_0 = arith.constant 0 : i32
    return %arg0, %c0_i32 : i32, i32
  }
  func.func @transform_1(%arg0: i32) -> (i32, i32) {
    %c0_i32 = arith.constant 0 : i32
    %c0_i32_0 = arith.constant 0 : i32
    %c0_i32_1 = arith.constant 0 : i32
    return %c0_i32, %c0_i32_0 : i32, i32
  }
  func.func @transform_2(%arg0: i32) -> (i32, i32) {
    %c0_i32 = arith.constant 0 : i32
    %c0_i32_0 = arith.constant 0 : i32
    %c0_i32_1 = arith.constant 0 : i32
    return %c0_i32, %c0_i32_0 : i32, i32
  }
  func.func @transform_3(%arg0: i32) -> (i32, i32) {
    %c0_i32 = arith.constant 0 : i32
    %c0_i32_0 = arith.constant 0 : i32
    return %arg0, %c0_i32 : i32, i32
  }
}

</mosaic_0001>

<llo_original>
// kernel: tpu_custom_call.1
$region0: #{tpu_custom_call.1}
  #allocation0 [shape = 'u32[]', space=smem, size = 0x4, offset = 0x4, fixed_abs, tag = 'smem constant byte address 0x4 - core index']
  #allocation1 [shape = 'u32[144,128]{1,0:T(1,128)}', space=vmem, size = 0x12000, scoped, tag = 'internal scratch']
  %s0 = inlined_call_operand.hbm [shape: f32[16,128], index: 0, kind: input, shape index: {}]
  %s1 = inlined_call_operand.hbm [shape: f32[128,128], index: 1, kind: input, shape index: {}]
  %s2 = inlined_call_operand.vmem [shape: f32[1,128], index: 2, kind: input, shape index: {}]
  %s3 = inlined_call_operand.hbm [shape: f32[16,128], index: 3, kind: output, shape index: {}]
  %s4 = sld [smem:[#allocation0]]
  $region30: #{tpu_custom_call.1} parent=0
    _
  %s6 = ssub.s32 1, %s4
  %s7 = scalar_select 0, %s6, %s4
  $region1: #{tpu_custom_call.1} parent=0
    #allocation2 [shape = 'u8[8192]{0}', space=vmem, size = 0x2000, scoped, tag = 'input window, operand 0, single buffered']
    #allocation3 [shape = 's32[1]{0}', space=sflag, size = 0x4, scoped, tag = 'scoped memory for tpu_custom_call.1']
    #allocation4 [shape = 's32[1]{0}', space=sflag, size = 0x4, scoped, tag = 'scoped memory for tpu_custom_call.1']
    #allocation5 [shape = 'u8[65536]{0}', space=vmem, size = 0x10000, scoped, tag = 'input window, operand 1, single buffered']
    #allocation6 [shape = 's32[1]{0}', space=sflag, size = 0x4, scoped, tag = 'scoped memory for tpu_custom_call.1']
    #allocation7 [shape = 'u8[8192]{0}', space=vmem, size = 0x2000, scoped, tag = 'output window, operand 0, single buffered']
    %8 = vsyncpa [#allocation3], 0
    %9 = vsyncpa [#allocation6], 0
    %10 = vsyncpa [#allocation4], 0
    // Predicated region
    $region2: #{tpu_custom_call.1} parent=1 // pred_check
      _
    $region3: #{tpu_custom_call.1} parent=1 // pred_check_branch
      %12 = sbr.rel (0) target = $region5
    $region4: #{tpu_custom_call.1} parent=1 // pred_region
      %s14 = ssub.s32 256, 256
      %15 = vsyncadd [#allocation3], %s14
      %s16 = sshll.u32 [#allocation2], 4
      %s17 = int_to_ptr.vmem [resolvable:$true] %s16
      %22 = dma.hbm_to_vmem [thread:$0]  %s0, 256, %s17, [#allocation3], 128, 128, 8
    $region5: #{tpu_custom_call.1} parent=1 // pred_fallthru
      _
    // Predicated region
    $region6: #{tpu_custom_call.1} parent=1 // pred_check
      _
    $region7: #{tpu_custom_call.1} parent=1 // pred_check_branch
      %24 = sbr.rel (0) target = $region9
    $region8: #{tpu_custom_call.1} parent=1 // pred_region
      %s26 = ssub.s32 2048, 2048
      %27 = vsyncadd [#allocation6], %s26
      %s28 = sshll.u32 [#allocation5], 4
      %s29 = int_to_ptr.vmem [resolvable:$true] %s28
      %34 = dma.hbm_to_vmem [thread:$0]  %s1, 2048, %s29, [#allocation6], 128, 128, 8
    $region9: #{tpu_custom_call.1} parent=1 // pred_fallthru
      _
    // Predicated region
    $region10: #{tpu_custom_call.1} parent=1 // pred_check
      _
    $region11: #{tpu_custom_call.1} parent=1 // pred_check_branch
      %36 = sbr.rel (0) target = $region13
    $region12: #{tpu_custom_call.1} parent=1 // pred_region
      _
    $region13: #{tpu_custom_call.1} parent=1 // pred_fallthru
      _
    // Predicated region
    $region14: #{tpu_custom_call.1} parent=1 // pred_check
      _
    $region15: #{tpu_custom_call.1} parent=1 // pred_check_branch
      %38 = sbr.rel (0) target = $region17
    $region16: #{tpu_custom_call.1} parent=1 // pred_region
      %39 = dma.done [#allocation3], 256
    $region17: #{tpu_custom_call.1} parent=1 // pred_fallthru
      _
    // Predicated region
    $region18: #{tpu_custom_call.1} parent=1 // pred_check
      _
    $region19: #{tpu_custom_call.1} parent=1 // pred_check_branch
      %41 = sbr.rel (0) target = $region21
    $region20: #{tpu_custom_call.1} parent=1 // pred_region
      %42 = dma.done [#allocation6], 2048
    $region21: #{tpu_custom_call.1} parent=1 // pred_fallthru
      _
    %v43 = vld [vmem:[#allocation2] sm:$0xff]
    %v44 = vld [vmem:[#allocation2 + $0x8] sm:$0xff]
    %v45 = vld [vmem:[#allocation5] sm:$0xff]
    %v46 = vld [vmem:[#allocation5 + $0x8] sm:$0xff]
    %v47 = vld [vmem:[#allocation5 + $0x10] sm:$0xff]
    %v48 = vld [vmem:[#allocation5 + $0x18] sm:$0xff]
    %v49 = vld [vmem:[#allocation5 + $0x20] sm:$0xff]
    %v50 = vld [vmem:[#allocation5 + $0x28] sm:$0xff]
    %v51 = vld [vmem:[#allocation5 + $0x30] sm:$0xff]
    %v52 = vld [vmem:[#allocation5 + $0x38] sm:$0xff]
    %v53 = vld [vmem:[#allocation5 + $0x40] sm:$0xff]
    %v54 = vld [vmem:[#allocation5 + $0x48] sm:$0xff]
    %v55 = vld [vmem:[#allocation5 + $0x50] sm:$0xff]
    %v56 = vld [vmem:[#allocation5 + $0x58] sm:$0xff]
    %v57 = vld [vmem:[#allocation5 + $0x60] sm:$0xff]
    %v58 = vld [vmem:[#allocation5 + $0x68] sm:$0xff]
    %v59 = vld [vmem:[#allocation5 + $0x70] sm:$0xff]
    %v60 = vld [vmem:[#allocation5 + $0x78] sm:$0xff]
    %v61 = vld [vmem:[%s2] sm:$0x1]
    %v63 = vlaneseq
    %v64 = vshrl.u32 %v63, 7
    %v65 = vsub.s32 0, %v64
    %v66 = vrot.slane %v61, %v65
    %68 = vmatprep.subr.mxu0 0.0
    %69 = vmatpush1.msra.mxu0 %v45
    %70 = vmatprep.subr.mxu0 0.0
    %71 = vmatpush1.msra.mxu0 %v46
    %72 = vmatprep.subr.mxu0 0.0
    %73 = vmatpush1.msra.mxu0 %v47
    %74 = vmatprep.subr.mxu0 0.0
    %75 = vmatpush1.msra.mxu0 %v48
    %76 = vmatprep.subr.mxu0 0.0
    %77 = vmatpush1.msra.mxu0 %v49
    %78 = vmatprep.subr.mxu0 0.0
    %79 = vmatpush1.msra.mxu0 %v50
    %80 = vmatprep.subr.mxu0 0.0
    %81 = vmatpush1.msra.mxu0 %v51
    %82 = vmatprep.subr.mxu0 0.0
    %83 = vmatpush1.msra.mxu0 %v52
    %84 = vmatprep.subr.mxu0 0.0
    %85 = vmatpush1.msra.mxu0 %v53
    %86 = vmatprep.subr.mxu0 0.0
    %87 = vmatpush1.msra.mxu0 %v54
    %88 = vmatprep.subr.mxu0 0.0
    %89 = vmatpush1.msra.mxu0 %v55
    %90 = vmatprep.subr.mxu0 0.0
    %91 = vmatpush1.msra.mxu0 %v56
    %92 = vmatprep.subr.mxu0 0.0
    %93 = vmatpush1.msra.mxu0 %v57
    %94 = vmatprep.subr.mxu0 0.0
    %95 = vmatpush1.msra.mxu0 %v58
    %96 = vmatprep.subr.mxu0 0.0
    %97 = vmatpush1.msra.mxu0 %v59
    %98 = vmatprep.subr.mxu0 0.0
    %99 = vmatpush1.msra.mxu0 %v60
    %100 = vmatprep.subr.mxu0 0.0
    %101 = vmatpush1.msra.mxu0 0.0
    %102 = vmatprep.subr.mxu0 0.0
    %103 = vmatpush1.msra.mxu0 0.0
    %104 = vmatprep.subr.mxu0 0.0
    %105 = vmatpush1.msra.mxu0 0.0
    %106 = vmatprep.subr.mxu0 0.0
    %107 = vmatpush1.msra.mxu0 0.0
    %108 = vmatprep.subr.mxu0 0.0
    %109 = vmatpush1.msra.mxu0 0.0
    %110 = vmatprep.subr.mxu0 0.0
    %111 = vmatpush1.msra.mxu0 0.0
    %112 = vmatprep.subr.mxu0 0.0
    %113 = vmatpush1.msra.mxu0 0.0
    %114 = vmatprep.subr.mxu0 0.0
    %115 = vmatpush1.msra.mxu0 0.0
    %116 = vmatprep.subr.mxu0 0.0
    %117 = vmatpush1.msra.mxu0 0.0
    %118 = vmatprep.subr.mxu0 0.0
    %119 = vmatpush1.msra.mxu0 0.0
    %120 = vmatprep.subr.mxu0 0.0
    %121 = vmatpush1.msra.mxu0 0.0
    %122 = vmatprep.subr.mxu0 0.0
    %123 = vmatpush1.msra.mxu0 0.0
    %124 = vmatprep.subr.mxu0 0.0
    %125 = vmatpush1.msra.mxu0 0.0
    %126 = vmatprep.subr.mxu0 0.0
    %127 = vmatpush1.msra.mxu0 0.0
    %128 = vmatprep.subr.mxu0 0.0
    %129 = vmatpush1.msra.mxu0 0.0
    %130 = vmatprep.subr.mxu0 0.0
    %131 = vmatpush1.msra.mxu0 0.0
    %132 = vmatprep.mubr.f32.mxu0 0.0
    %133 = vmatmul.mubr.f32.gmra.mrb[0].mxu0 %v43
    %v134 = vpop.f32.mrb[0].mxu0
    %v135 = vadd.f32 %v66, %v134
    %v136 = vpop.f32.mrb[0].mxu0
    %137 = vmatprep.mubr.f32.mxu0 0.0
    %138 = vmatmul.mubr.f32.gmra.mrb[0].mxu0 %v44
    %v139 = vpop.f32.mrb[0].mxu0
    %v140 = vadd.f32 %v66, %v139
    %v141 = vpop.f32.mrb[0].mxu0
    %142 = vdwg.mxu0
    %v143 = vmax.f32 %v135, 0.0
    %v144 = vmax.f32 %v140, 0.0
    %145 = vst [vmem:[#allocation7] sm:$0xff] %v143
    %146 = vst [vmem:[#allocation7 + $0x8] sm:$0xff] %v144
    // Predicated region
    $region22: #{tpu_custom_call.1} parent=1 // pred_check
      _
    $region23: #{tpu_custom_call.1} parent=1 // pred_check_branch
      %148 = sbr.rel (0) target = $region25
    $region24: #{tpu_custom_call.1} parent=1 // pred_region
      %s150 = ssub.s32 256, 256
      %151 = vsyncadd [#allocation4], %s150
      %s152 = sshll.u32 [#allocation7], 4
      %s153 = int_to_ptr.vmem [resolvable:$true] %s152
      %158 = dma.vmem_to_hbm [thread:$0]  %s153, 256, %s3, [#allocation4], 128, 128, 8
    $region25: #{tpu_custom_call.1} parent=1 // pred_fallthru
      _
    // Predicated region
    $region26: #{tpu_custom_call.1} parent=1 // pred_check
      _
    $region27: #{tpu_custom_call.1} parent=1 // pred_check_branch
      %160 = sbr.rel (0) target = $region29
    $region28: #{tpu_custom_call.1} parent=1 // pred_region
      %161 = dma.done [#allocation4], 256
    $region29: #{tpu_custom_call.1} parent=1 // pred_fallthru
      _
    %162 = vsyncpa [#allocation3], 1
    %163 = vsyncpa [#allocation6], 1
    %164 = vsyncpa [#allocation4], 1

</llo_original>
